<compile_context>
chip_gen: v7x
topology: tpu7x:2x2x1
jax: 0.10.0
libtpu: 0.0.40
codegen_flags: <defaults>
</compile_context>

<pallas_src>
import functools

import jax
import jax.numpy as jnp
from jax.experimental import pallas as pl
from jax.experimental.pallas import tpu as pltpu


# ---------------------------------------------------------------------------
# helpers
# ---------------------------------------------------------------------------

def _pick_tile(dim, candidates):
    for c in candidates:
        if dim % c == 0:
            return c
    return dim  # fall back to the full dim (block == array dim is always legal)


def _vmem_limit_bytes():
    cap = 64 * 1024 * 1024  # conservative default: v7x per-TC physical VMEM
    try:
        info = pltpu.get_tpu_info()
        cap = int(getattr(info, "vmem_capacity_bytes", cap))
    except Exception:
        pass
    # ~25% headroom for compiler-internal scratch; raises the small default scoped
    # limits on v5e/v6e while staying well inside v7x's 64 MiB.
    return max(32 * 1024 * 1024, min(cap * 3 // 4, 112 * 1024 * 1024))


# ---------------------------------------------------------------------------
# Stage 1: fused QKV projection (tiled matmul + bias)
# ---------------------------------------------------------------------------

def _linear_kernel(x_ref, w_ref, b_ref, o_ref, acc_ref):
    @pl.when(pl.program_id(2) == 0)
    def _():
        acc_ref[...] = jnp.zeros_like(acc_ref)

    acc_ref[...] += jnp.dot(x_ref[...], w_ref[...],
                            preferred_element_type=jnp.float32)

    @pl.when(pl.program_id(2) == pl.num_programs(2) - 1)
    def _():
        o_ref[...] = (acc_ref[...] + b_ref[...]).astype(o_ref.dtype)


def _fused_linear(x2d, w, b2d, *, out_dtype, vmem_limit):
    rows, K = x2d.shape
    _, N = w.shape
    tm = _pick_tile(rows, (256, 128))
    tn = _pick_tile(N, (512, 256, 128))
    tk = _pick_tile(K, (512, 256, 128))
    grid = (rows // tm, N // tn, K // tk)
    return pl.pallas_call(
        _linear_kernel,
        out_shape=jax.ShapeDtypeStruct((rows, N), out_dtype),
        grid_spec=pltpu.PrefetchScalarGridSpec(
            num_scalar_prefetch=0,
            grid=grid,
            in_specs=[
                pl.BlockSpec((tm, tk), lambda i, j, k: (i, k)),
                pl.BlockSpec((tk, tn), lambda i, j, k: (k, j)),
                pl.BlockSpec((1, tn), lambda i, j, k: (0, j)),
            ],
            out_specs=pl.BlockSpec((tm, tn), lambda i, j, k: (i, j)),
            scratch_shapes=[pltpu.VMEM((tm, tn), jnp.float32)],
        ),
        compiler_params=pltpu.CompilerParams(
            dimension_semantics=("parallel", "parallel", "arbitrary"),
            vmem_limit_bytes=vmem_limit),
    )(x2d, w, b2d)


# ---------------------------------------------------------------------------
# Stage 2: flash-style causal attention fused with the merge projection
# ---------------------------------------------------------------------------

def _flash_mha_kernel(q_ref, k_ref, v_ref, wm_ref, bm_ref, o_ref,
                      m_s, l_s, acc_s, out_s, *, scale, q_block, kv_block):
    qi = pl.program_id(1)
    h = pl.program_id(2)
    ki = pl.program_id(3)
    n_h = pl.num_programs(2)
    n_kv = pl.num_programs(3)

    # Cross-head merge accumulator: init at the first (head, kv) step of this tile.
    @pl.when((h == 0) & (ki == 0))
    def _():
        out_s[...] = jnp.zeros_like(out_s)

    # Flash stats: re-init at the first kv block of every head.
    @pl.when(ki == 0)
    def _():
        m_s[...] = jnp.full_like(m_s, -jnp.inf)
        l_s[...] = jnp.zeros_like(l_s)
        acc_s[...] = jnp.zeros_like(acc_s)

    q_start = qi * q_block
    kv_start = ki * kv_block

    # Causal block skipping: kv blocks entirely above the diagonal contribute nothing.
    @pl.when(kv_start <= q_start + (q_block - 1))
    def _():
        q = q_ref[0, 0]                                   # (tq, D)
        k = k_ref[0, 0]                                   # (tkv, D)
        v = v_ref[0, 0]                                   # (tkv, D)

        # scores: contract head dims directly (no transpose op), f32 MXU accumulation.
        s = jax.lax.dot_general(q, k, (((1,), (1,)), ((), ())),
                                preferred_element_type=jnp.float32) * scale

        rows = q_start + jax.lax.broadcasted_iota(jnp.int32, (q_block, kv_block), 0)
        cols = kv_start + jax.lax.broadcasted_iota(jnp.int32, (q_block, kv_block), 1)
        # Large finite negative (not -inf): fully-masked rows can never produce NaN.
        s = jnp.where(rows >= cols, s, -1e30)

        m_prev = m_s[...]
        m_new = jnp.maximum(m_prev, jnp.max(s, axis=-1, keepdims=True))
        alpha = jnp.exp(m_prev - m_new)
        p = jnp.exp(s - m_new)
        l_s[...] = alpha * l_s[...] + jnp.sum(p, axis=-1, keepdims=True)
        acc_s[...] = alpha * acc_s[...] + jnp.dot(
            p.astype(v.dtype), v, preferred_element_type=jnp.float32)
        m_s[...] = m_new

    # Per-head finalize: normalize and fold this head's slice of the merge matmul.
    @pl.when(ki == n_kv - 1)
    def _():
        head_out = acc_s[...] * pl.reciprocal(l_s[...], approx=True)   # (tq, D) f32
        wm_h = wm_ref[0]                                               # (D, E)
        out_s[...] += jnp.dot(head_out.astype(wm_h.dtype), wm_h,
                              preferred_element_type=jnp.float32)

    # Final write for this (batch, q-tile) output block.
    @pl.when((h == n_h - 1) & (ki == n_kv - 1))
    def _():
        o_ref[0] = (out_s[...] + bm_ref[...]).astype(o_ref.dtype)


def multi_head_attention(x, params, *, num_heads, head_size, n_embed,
                         q_block=None, kv_block=None, compute_dtype=None):
    B, T, E = x.shape
    assert E == n_embed
    HD = num_heads * head_size
    wq, bq, wk, bk, wv, bv, wm, bm = params

    if compute_dtype is None:
        compute_dtype = x.dtype    # pass bf16 x / params for the fast bf16 MXU path
    out_dtype = x.dtype
    vmem_limit = _vmem_limit_bytes()

    # ---- stage 1: fused QKV projection ----
    w_qkv = jnp.concatenate([wq, wk, wv], axis=1).astype(compute_dtype)      # (E, 3*HD)
    b_qkv = jnp.concatenate([bq, bk, bv], axis=0).reshape(1, 3 * HD).astype(jnp.float32)
    qkv = _fused_linear(x.astype(compute_dtype).reshape(B * T, E), w_qkv, b_qkv,
                        out_dtype=compute_dtype, vmem_limit=vmem_limit)

    # Layout plumbing (XLA, outside the kernel): per-head (B, H, T, D) so every
    # in-kernel slice is a lane-dense, full-last-dim tile.
    qkv = qkv.reshape(B, T, 3, num_heads, head_size)
    q = jnp.transpose(qkv[:, :, 0], (0, 2, 1, 3))
    k = jnp.transpose(qkv[:, :, 1], (0, 2, 1, 3))
    v = jnp.transpose(qkv[:, :, 2], (0, 2, 1, 3))

    wm3 = wm.reshape(num_heads, head_size, E).astype(compute_dtype)          # (H, D, E)
    bm2 = bm.reshape(1, E).astype(jnp.float32)

    # ---- stage 2: flash attention + merge ----
    tq = q_block if q_block is not None else _pick_tile(T, (256, 128))
    tkv = kv_block if kv_block is not None else _pick_tile(T, (256, 128))
    assert T % tq == 0 and T % tkv == 0
    assert (tq == T or tq % 8 == 0) and (tkv == T or tkv % 8 == 0)
    n_q, n_kv = T // tq, T // tkv

    # Module semantics: scale by 1/sqrt(n_embed), NOT 1/sqrt(head_size).
    scale = 1.0 / (float(n_embed) ** 0.5)

    kernel = functools.partial(_flash_mha_kernel, scale=scale,
                               q_block=tq, kv_block=tkv)

    return pl.pallas_call(
        kernel,
        out_shape=jax.ShapeDtypeStruct((B, T, E), out_dtype),
        grid_spec=pltpu.PrefetchScalarGridSpec(
            num_scalar_prefetch=0,
            grid=(B, n_q, num_heads, n_kv),
            in_specs=[
                pl.BlockSpec((1, 1, tq, head_size),
                             lambda b, qi, h, ki: (b, h, qi, 0)),   # Q
                pl.BlockSpec((1, 1, tkv, head_size),
                             lambda b, qi, h, ki: (b, h, ki, 0)),   # K
                pl.BlockSpec((1, 1, tkv, head_size),
                             lambda b, qi, h, ki: (b, h, ki, 0)),   # V
                pl.BlockSpec((1, head_size, E),
                             lambda b, qi, h, ki: (h, 0, 0)),       # merge weight slice
                pl.BlockSpec((1, E),
                             lambda b, qi, h, ki: (0, 0)),          # merge bias
            ],
            out_specs=pl.BlockSpec((1, tq, E), lambda b, qi, h, ki: (b, qi, 0)),
            scratch_shapes=[
                pltpu.VMEM((tq, 1), jnp.float32),           # running max
                pltpu.VMEM((tq, 1), jnp.float32),           # running denominator
                pltpu.VMEM((tq, head_size), jnp.float32),   # per-head output acc
                pltpu.VMEM((tq, E), jnp.float32),           # cross-head merge acc
            ],
        ),
        compiler_params=pltpu.CompilerParams(
            dimension_semantics=("parallel", "parallel", "arbitrary", "arbitrary"),
            vmem_limit_bytes=vmem_limit),
    )(q, k, v, wm3, bm2)


# ---------------------------------------------------------------------------
# Parameters + pure-JAX reference (eval-mode dropout)
# ---------------------------------------------------------------------------

def make_params(key, n_embed, num_heads, head_size):
    HD = num_heads * head_size
    keys = jax.random.split(key, 8)
    s_in = 1.0 / (n_embed ** 0.5)
    s_hd = 1.0 / (HD ** 0.5)
    wq = jax.random.uniform(keys[0], (n_embed, HD), jnp.float32, -s_in, s_in)
    bq = jax.random.uniform(keys[1], (HD,), jnp.float32, -s_in, s_in)
    wk = jax.random.uniform(keys[2], (n_embed, HD), jnp.float32, -s_in, s_in)
    bk = jax.random.uniform(keys[3], (HD,), jnp.float32, -s_in, s_in)
    wv = jax.random.uniform(keys[4], (n_embed, HD), jnp.float32, -s_in, s_in)
    bv = jax.random.uniform(keys[5], (HD,), jnp.float32, -s_in, s_in)
    wm = jax.random.uniform(keys[6], (HD, n_embed), jnp.float32, -s_hd, s_hd)
    bm = jax.random.uniform(keys[7], (n_embed,), jnp.float32, -s_hd, s_hd)
    return (wq, bq, wk, bk, wv, bv, wm, bm)


def reference(x, params, *, num_heads, head_size, n_embed):
    wq, bq, wk, bk, wv, bv, wm, bm = params
    B, T, E = x.shape

    def split_heads(y):
        return jnp.transpose(y.reshape(B, T, num_heads, head_size), (0, 2, 1, 3))

    q = split_heads(x @ wq + bq)
    k = split_heads(x @ wk + bk)
    v = split_heads(x @ wv + bv)
    wei = jnp.einsum("bhqd,bhkd->bhqk", q, k) / (n_embed ** 0.5)
    tril = jnp.tril(jnp.ones((T, T), dtype=bool))
    wei = jnp.where(tril, wei, -jnp.inf)
    wei = jax.nn.softmax(wei, axis=-1)
    out = jnp.einsum("bhqk,bhkd->bhqd", wei, v)
    out = jnp.transpose(out, (0, 2, 1, 3)).reshape(B, T, num_heads * head_size)
    return out @ wm + bm


if __name__ == "__main__":
    num_heads = 4
    head_size = 8
    ctxt_len = 8
    n_embed = 32
    B, T = 2, ctxt_len

    key = jax.random.PRNGKey(0)
    kx, kp = jax.random.split(key)
    x = jax.random.normal(kx, (B, T, n_embed), jnp.float32)
    params = make_params(kp, n_embed, num_heads, head_size)

    out = multi_head_attention(x, params, num_heads=num_heads,
                               head_size=head_size, n_embed=n_embed)
    out = jax.block_until_ready(out)

    ref = reference(x, params, num_heads=num_heads,
                    head_size=head_size, n_embed=n_embed)
    assert out.shape == (B, T, n_embed)
    # Tolerance accounts for the EUP approximate reciprocal in the softmax denominator.
    assert jnp.allclose(out, ref, atol=1e-2, rtol=1e-2), "mismatch vs reference"
    print("KERNEL_OK")
</pallas_src>

<mosaic_0001>
module attributes {stable_mosaic.version = 11 : i64} {
  func.func @_linear_kernel(%arg0: i32, %arg1: i32, %arg2: i32, %arg3: memref<16x32xf32, #tpu.memory_space<vmem>>, %arg4: memref<32x96xf32, #tpu.memory_space<vmem>>, %arg5: memref<1x96xf32, #tpu.memory_space<vmem>>, %arg6: memref<16x96xf32, #tpu.memory_space<vmem>>, %arg7: memref<16x96xf32, #tpu.memory_space<vmem>>) attributes {dimension_semantics = [#tpu.dimension_semantics<parallel>, #tpu.dimension_semantics<parallel>, #tpu.dimension_semantics<arbitrary>], iteration_bounds = array<i64: 1, 1, 1>, scalar_prefetch = 0 : i64, scratch_operands = 1 : i64, tpu.core_type = #tpu.core_type<tc>, window_params = [{transform_indices = @transform_0, window_bounds = array<i64: 16, 32>}, {transform_indices = @transform_1, window_bounds = array<i64: 32, 96>}, {transform_indices = @transform_2, window_bounds = array<i64: 1, 96>}, {transform_indices = @transform_3, window_bounds = array<i64: 16, 96>}]} {
    %c0_i32 = arith.constant 0 : i32
    %0 = arith.cmpi eq, %arg2, %c0_i32 : i32
    %1 = arith.extui %0 : i1 to i32
    %c0_i32_0 = arith.constant 0 : i32
    %2 = arith.cmpi ne, %1, %c0_i32_0 : i32
    scf.if %2 {
      %cst_10 = arith.constant 0.000000e+00 : f32
      %12 = vector.broadcast %cst_10 : f32 to vector<16x96xf32>
      %c0_11 = arith.constant 0 : index
      %c0_12 = arith.constant 0 : index
      %13 = vector.load %arg7[%c0_11, %c0_12] : memref<16x96xf32, #tpu.memory_space<vmem>>, vector<16x96xf32>
      tpu.vector_store %arg7[%c0_11, %c0_12], %12 {strides = array<i32>} : memref<16x96xf32, #tpu.memory_space<vmem>>, vector<16x96xf32>,
    } else {
    }
    %c0 = arith.constant 0 : index
    %c0_1 = arith.constant 0 : index
    %3 = vector.load %arg7[%c0, %c0_1] : memref<16x96xf32, #tpu.memory_space<vmem>>, vector<16x96xf32>
    %c0_2 = arith.constant 0 : index
    %c0_3 = arith.constant 0 : index
    %4 = vector.load %arg3[%c0_2, %c0_3] : memref<16x32xf32, #tpu.memory_space<vmem>>, vector<16x32xf32>
    %c0_4 = arith.constant 0 : index
    %c0_5 = arith.constant 0 : index
    %5 = vector.load %arg4[%c0_4, %c0_5] : memref<32x96xf32, #tpu.memory_space<vmem>>, vector<32x96xf32>
    %cst = arith.constant dense<0.000000e+00> : vector<16x96xf32>
    %6 = tpu.matmul %4, %5, %cst {dimension_numbers = #tpu.dot_dimension_numbers<[1], [0], [0], [1], [0, 0, 1, 1], [], []>} : vector<16x32xf32>, vector<32x96xf32>, vector<16x96xf32> -> vector<16x96xf32>
    %7 = arith.addf %3, %6 : vector<16x96xf32>
    %c0_6 = arith.constant 0 : index
    %c0_7 = arith.constant 0 : index
    %8 = vector.load %arg7[%c0_6, %c0_7] : memref<16x96xf32, #tpu.memory_space<vmem>>, vector<16x96xf32>
    tpu.vector_store %arg7[%c0_6, %c0_7], %7 {strides = array<i32>} : memref<16x96xf32, #tpu.memory_space<vmem>>, vector<16x96xf32>,
    %c0_i32_8 = arith.constant 0 : i32
    %9 = arith.cmpi eq, %arg2, %c0_i32_8 : i32
    %10 = arith.extui %9 : i1 to i32
    %c0_i32_9 = arith.constant 0 : i32
    %11 = arith.cmpi ne, %10, %c0_i32_9 : i32
    scf.if %11 {
      %c0_10 = arith.constant 0 : index
      %c0_11 = arith.constant 0 : index
      %12 = vector.load %arg7[%c0_10, %c0_11] : memref<16x96xf32, #tpu.memory_space<vmem>>, vector<16x96xf32>
      %c0_12 = arith.constant 0 : index
      %c0_13 = arith.constant 0 : index
      %13 = vector.load %arg5[%c0_12, %c0_13] : memref<1x96xf32, #tpu.memory_space<vmem>>, vector<1x96xf32>
      %14 = vector.broadcast %13 : vector<1x96xf32> to vector<16x96xf32>
      %15 = arith.addf %12, %14 : vector<16x96xf32>
      %c0_14 = arith.constant 0 : index
      %c0_15 = arith.constant 0 : index
      %16 = vector.load %arg6[%c0_14, %c0_15] : memref<16x96xf32, #tpu.memory_space<vmem>>, vector<16x96xf32>
      tpu.vector_store %arg6[%c0_14, %c0_15], %15 {strides = array<i32>} : memref<16x96xf32, #tpu.memory_space<vmem>>, vector<16x96xf32>,
    } else {
    }
    return
  }
  func.func @transform_0(%arg0: i32, %arg1: i32, %arg2: i32) -> (i32, i32) {
    %c0_i32 = arith.constant 0 : i32
    return %arg0, %arg2 : i32, i32
  }
  func.func @transform_1(%arg0: i32, %arg1: i32, %arg2: i32) -> (i32, i32) {
    %c0_i32 = arith.constant 0 : i32
    return %arg2, %arg1 : i32, i32
  }
  func.func @transform_2(%arg0: i32, %arg1: i32, %arg2: i32) -> (i32, i32) {
    %c0_i32 = arith.constant 0 : i32
    %c0_i32_0 = arith.constant 0 : i32
    return %c0_i32, %arg1 : i32, i32
  }
  func.func @transform_3(%arg0: i32, %arg1: i32, %arg2: i32) -> (i32, i32) {
    %c0_i32 = arith.constant 0 : i32
    return %arg0, %arg1 : i32, i32
  }
}

</mosaic_0001>

<llo_original>
// kernel: tpu_custom_call.1
$region0: #{tpu_custom_call.1}
  #allocation0 [shape = 'u32[]', space=smem, size = 0x4, offset = 0x4, fixed_abs, tag = 'smem constant byte address 0x4 - core index']
  #allocation1 [shape = 'u32[144,128]{1,0:T(1,128)}', space=vmem, size = 0x12000, scoped, tag = 'internal scratch']
  #allocation2 [shape = 'f32[16,96]{1,0:T(8,128)}', space=vmem, size = 0x2000, scoped, tag = 'scratch operand']
  %s0 = inlined_call_operand.hbm [shape: f32[16,32], index: 0, kind: input, shape index: {}]
  %s1 = inlined_call_operand.hbm [shape: f32[32,96], index: 1, kind: input, shape index: {}]
  %s2 = inlined_call_operand.vmem [shape: f32[1,96], index: 2, kind: input, shape index: {}]
  %s3 = inlined_call_operand.hbm [shape: f32[16,96], index: 3, kind: output, shape index: {}]
  %s4 = sld [smem:[#allocation0]]
  $region38: #{tpu_custom_call.1} parent=0
    _
  %s6 = ssub.s32 1, %s4
  %s7 = scalar_select 0, %s6, %s4
  $region1: #{tpu_custom_call.1} parent=0
    #allocation3 [shape = 'u8[8192]{0}', space=vmem, size = 0x2000, scoped, tag = 'input window, operand 0, single buffered']
    #allocation4 [shape = 's32[1]{0}', space=sflag, size = 0x4, scoped, tag = 'scoped memory for tpu_custom_call.1']
    #allocation5 [shape = 's32[1]{0}', space=sflag, size = 0x4, scoped, tag = 'scoped memory for tpu_custom_call.1']
    #allocation6 [shape = 'u8[16384]{0}', space=vmem, size = 0x4000, scoped, tag = 'input window, operand 1, single buffered']
    #allocation7 [shape = 's32[1]{0}', space=sflag, size = 0x4, scoped, tag = 'scoped memory for tpu_custom_call.1']
    #allocation8 [shape = 'u8[8192]{0}', space=vmem, size = 0x2000, scoped, tag = 'output window, operand 0, single buffered']
    %8 = vsyncpa [#allocation4], 0
    %9 = vsyncpa [#allocation7], 0
    %10 = vsyncpa [#allocation5], 0
    // Predicated region
    $region2: #{tpu_custom_call.1} parent=1 // pred_check
      _
    $region3: #{tpu_custom_call.1} parent=1 // pred_check_branch
      %12 = sbr.rel (0) target = $region5
    $region4: #{tpu_custom_call.1} parent=1 // pred_region
      %s14 = ssub.s32 256, 256
      %15 = vsyncadd [#allocation4], %s14
      %s16 = sshll.u32 [#allocation3], 4
      %s17 = int_to_ptr.vmem [resolvable:$true] %s16
      %22 = dma.hbm_to_vmem [thread:$0]  %s0, 256, %s17, [#allocation4], 128, 128, 8
    $region5: #{tpu_custom_call.1} parent=1 // pred_fallthru
      _
    // Predicated region
    $region6: #{tpu_custom_call.1} parent=1 // pred_check
      _
    $region7: #{tpu_custom_call.1} parent=1 // pred_check_branch
      %24 = sbr.rel (0) target = $region9
    $region8: #{tpu_custom_call.1} parent=1 // pred_region
      %s26 = ssub.s32 512, 512
      %27 = vsyncadd [#allocation7], %s26
      %s28 = sshll.u32 [#allocation6], 4
      %s29 = int_to_ptr.vmem [resolvable:$true] %s28
      %34 = dma.hbm_to_vmem [thread:$0]  %s1, 512, %s29, [#allocation7], 128, 128, 8
    $region9: #{tpu_custom_call.1} parent=1 // pred_fallthru
      _
    // Predicated region
    $region10: #{tpu_custom_call.1} parent=1 // pred_check
      _
    $region11: #{tpu_custom_call.1} parent=1 // pred_check_branch
      %36 = sbr.rel (0) target = $region13
    $region12: #{tpu_custom_call.1} parent=1 // pred_region
      _
    $region13: #{tpu_custom_call.1} parent=1 // pred_fallthru
      _
    // Predicated region
    $region14: #{tpu_custom_call.1} parent=1 // pred_check
      _
    $region15: #{tpu_custom_call.1} parent=1 // pred_check_branch
      %38 = sbr.rel (0) target = $region17
    $region16: #{tpu_custom_call.1} parent=1 // pred_region
      %39 = dma.done [#allocation4], 256
    $region17: #{tpu_custom_call.1} parent=1 // pred_fallthru
      _
    // Predicated region
    $region18: #{tpu_custom_call.1} parent=1 // pred_check
      _
    $region19: #{tpu_custom_call.1} parent=1 // pred_check_branch
      %41 = sbr.rel (0) target = $region21
    $region20: #{tpu_custom_call.1} parent=1 // pred_region
      %42 = dma.done [#allocation7], 512
    $region21: #{tpu_custom_call.1} parent=1 // pred_fallthru
      _
    %p43 = scmp.eq.s32.totalorder 0, 0
    // Predicated region
    $region22: #{tpu_custom_call.1} parent=1 // pred_check
      %p44 = pneg %p43
    $region23: #{tpu_custom_call.1} parent=1 // pred_check_branch
      %46 = sbr.rel (%p44) target = $region25
    $region24: #{tpu_custom_call.1} parent=1 // pred_region
      %vm47 = vcmask 785408
      %48 = vst.msk [vmem:[#allocation2] sm:$0xff] %vm47, 0.0
      %49 = vst.msk [vmem:[#allocation2 + $0x8] sm:$0xff] %vm47, 0.0
    $region25: #{tpu_custom_call.1} parent=1 // pred_fallthru
      _
    %v50 = vld [vmem:[#allocation2] sm:$0xff]
    %v51 = vld [vmem:[#allocation2 + $0x8] sm:$0xff]
    %v52 = vld [vmem:[#allocation3] sm:$0xff]
    %v53 = vld [vmem:[#allocation3 + $0x8] sm:$0xff]
    %v54 = vld [vmem:[#allocation6] sm:$0xff]
    %v55 = vld [vmem:[#allocation6 + $0x8] sm:$0xff]
    %v56 = vld [vmem:[#allocation6 + $0x10] sm:$0xff]
    %v57 = vld [vmem:[#allocation6 + $0x18] sm:$0xff]
    %vm58 = vcmask 261120
    %v60 = vsel %vm58, %v52, 0
    %v63 = vsel %vm58, %v53, 0
    %65 = vmatprep.subr.mxu0 0.0
    %66 = vmatpush1.msra.mxu0 %v54
    %67 = vmatprep.subr.mxu0 0.0
    %68 = vmatpush1.msra.mxu0 %v55
    %69 = vmatprep.subr.mxu0 0.0
    %70 = vmatpush1.msra.mxu0 %v56
    %71 = vmatprep.subr.mxu0 0.0
    %72 = vmatpush1.msra.mxu0 %v57
    %73 = vmatprep.subr.mxu0 0.0
    %74 = vmatpush1.msra.mxu0 0.0
    %75 = vmatprep.subr.mxu0 0.0
    %76 = vmatpush1.msra.mxu0 0.0
    %77 = vmatprep.subr.mxu0 0.0
    %78 = vmatpush1.msra.mxu0 0.0
    %79 = vmatprep.subr.mxu0 0.0
    %80 = vmatpush1.msra.mxu0 0.0
    %81 = vmatprep.subr.mxu0 0.0
    %82 = vmatpush1.msra.mxu0 0.0
    %83 = vmatprep.subr.mxu0 0.0
    %84 = vmatpush1.msra.mxu0 0.0
    %85 = vmatprep.subr.mxu0 0.0
    %86 = vmatpush1.msra.mxu0 0.0
    %87 = vmatprep.subr.mxu0 0.0
    %88 = vmatpush1.msra.mxu0 0.0
    %89 = vmatprep.subr.mxu0 0.0
    %90 = vmatpush1.msra.mxu0 0.0
    %91 = vmatprep.subr.mxu0 0.0
    %92 = vmatpush1.msra.mxu0 0.0
    %93 = vmatprep.subr.mxu0 0.0
    %94 = vmatpush1.msra.mxu0 0.0
    %95 = vmatprep.subr.mxu0 0.0
    %96 = vmatpush1.msra.mxu0 0.0
    %97 = vmatprep.subr.mxu0 0.0
    %98 = vmatpush1.msra.mxu0 0.0
    %99 = vmatprep.subr.mxu0 0.0
    %100 = vmatpush1.msra.mxu0 0.0
    %101 = vmatprep.subr.mxu0 0.0
    %102 = vmatpush1.msra.mxu0 0.0
    %103 = vmatprep.subr.mxu0 0.0
    %104 = vmatpush1.msra.mxu0 0.0
    %105 = vmatprep.subr.mxu0 0.0
    %106 = vmatpush1.msra.mxu0 0.0
    %107 = vmatprep.subr.mxu0 0.0
    %108 = vmatpush1.msra.mxu0 0.0
    %109 = vmatprep.subr.mxu0 0.0
    %110 = vmatpush1.msra.mxu0 0.0
    %111 = vmatprep.subr.mxu0 0.0
    %112 = vmatpush1.msra.mxu0 0.0
    %113 = vmatprep.subr.mxu0 0.0
    %114 = vmatpush1.msra.mxu0 0.0
    %115 = vmatprep.subr.mxu0 0.0
    %116 = vmatpush1.msra.mxu0 0.0
    %117 = vmatprep.subr.mxu0 0.0
    %118 = vmatpush1.msra.mxu0 0.0
    %119 = vmatprep.subr.mxu0 0.0
    %120 = vmatpush1.msra.mxu0 0.0
    %121 = vmatprep.subr.mxu0 0.0
    %122 = vmatpush1.msra.mxu0 0.0
    %123 = vmatprep.subr.mxu0 0.0
    %124 = vmatpush1.msra.mxu0 0.0
    %125 = vmatprep.subr.mxu0 0.0
    %126 = vmatpush1.msra.mxu0 0.0
    %127 = vmatprep.subr.mxu0 0.0
    %128 = vmatpush1.msra.mxu0 0.0
    %129 = vmatprep.mubr.f32.mxu0 0.0
    %130 = vmatmul.mubr.f32.gmra.mrb[0].mxu0 %v60
    %v131 = vpop.f32.mrb[0].mxu0
    %v132 = vadd.f32 0.0, %v131
    %v133 = vpop.f32.mrb[0].mxu0
    %134 = vmatprep.mubr.f32.mxu0 0.0
    %135 = vmatmul.mubr.f32.gmra.mrb[0].mxu0 %v63
    %v136 = vpop.f32.mrb[0].mxu0
    %v137 = vadd.f32 0.0, %v136
    %v138 = vpop.f32.mrb[0].mxu0
    %139 = vdwg.mxu0
    %v140 = vadd.f32 %v50, %v132
    %v141 = vadd.f32 %v51, %v137
    %vm142 = vcmask 785408
    %143 = vst.msk [vmem:[#allocation2] sm:$0xff] %vm142, %v140
    %144 = vst.msk [vmem:[#allocation2 + $0x8] sm:$0xff] %vm142, %v141
    // Predicated region
    $region26: #{tpu_custom_call.1} parent=1 // pred_check
      %p145 = pneg %p43
    $region27: #{tpu_custom_call.1} parent=1 // pred_check_branch
      %147 = sbr.rel (%p145) target = $region29
    $region28: #{tpu_custom_call.1} parent=1 // pred_region
      %v148 = vld [vmem:[#allocation2] sm:$0xff]
      %v149 = vld [vmem:[#allocation2 + $0x8] sm:$0xff]
      %v150 = vld [vmem:[%s2] sm:$0x1]
      %v152 = vlaneseq
      %v153 = vshrl.u32 %v152, 7
      %v154 = vsub.s32 0, %v153
      %v155 = vrot.slane %v150, %v154
      %v157 = vadd.f32 %v148, %v155
      %v158 = vadd.f32 %v149, %v155
      %159 = vst.msk [vmem:[#allocation8] sm:$0xff] %vm142, %v157
      %160 = vst.msk [vmem:[#allocation8 + $0x8] sm:$0xff] %vm142, %v158
    $region29: #{tpu_custom_call.1} parent=1 // pred_fallthru
      _
    // Predicated region
    $region30: #{tpu_custom_call.1} parent=1 // pred_check
      _
    $region31: #{tpu_custom_call.1} parent=1 // pred_check_branch
      %162 = sbr.rel (0) target = $region33
    $region32: #{tpu_custom_call.1} parent=1 // pred_region
      %s164 = ssub.s32 256, 256
      %165 = vsyncadd [#allocation5], %s164
      %s166 = sshll.u32 [#allocation8], 4
      %s167 = int_to_ptr.vmem [resolvable:$true] %s166
      %172 = dma.vmem_to_hbm [thread:$0]  %s167, 256, %s3, [#allocation5], 128, 128, 8
    $region33: #{tpu_custom_call.1} parent=1 // pred_fallthru
      _
    // Predicated region
    $region34: #{tpu_custom_call.1} parent=1 // pred_check
      _
    $region35: #{tpu_custom_call.1} parent=1 // pred_check_branch
      %174 = sbr.rel (0) target = $region37
    $region36: #{tpu_custom_call.1} parent=1 // pred_region
      %175 = dma.done [#allocation5], 256
    $region37: #{tpu_custom_call.1} parent=1 // pred_fallthru
      _
    %176 = vsyncpa [#allocation4], 1
    %177 = vsyncpa [#allocation7], 1
    %178 = vsyncpa [#allocation5], 1

</llo_original>
